<compile_context>
chip_gen: v6e
topology: v6e:2x2x1
jax: 0.10.0
libtpu: 0.0.40
codegen_flags: <defaults>
</compile_context>

<pallas_src>
import functools

import jax
import jax.numpy as jnp
from jax.experimental import pallas as pl
from jax.experimental.pallas import tpu as pltpu


def _pnode_kernel(state_ref, glob_ref, lamv_ref, w_ref, b_ref, out_ref):
    # state_ref : (B, N, K)        K = n_q*q_dim, feature index k = q*q_dim + d
    # glob_ref  : (B, N, d_in)
    # lamv_ref  : (1, 1, K)        = repeat(lambda, q_dim) / (n_q * q_dim)
    # w_ref     : (d_in, d_pad)    [glob2disp | glob2value | zero-pad] to 128 lanes
    # b_ref     : (1, d_pad)
    # out_ref   : (B*N, d_pad)     lane-dense unmasked store
    B, N, _ = state_ref.shape
    d_in = glob_ref.shape[-1]

    s = state_ref[...]                                   # (B, N, K)
    s_lam = s * lamv_ref[...]                            # single broadcast multiply

    # PathIntegral (general branch), fused into one batched K-wide MXU contraction:
    #   gram[b,n,m] = sum_{q,d} lam_q * state[b,q,n,d]*state[b,q,m,d] / (q_dim*n_q)
    gram = jax.lax.dot_general(
        s_lam, s, (((2,), (2,)), ((0,), (0,))),
        preferred_element_type=jnp.float32)               # (B, N, N)

    # Clip-rescale, decoupled from the MXU result path:
    #   rowsum(gram)[b,n] = sum_k s_lam[b,n,k] * colsum(s)[b,k]
    colsum = jnp.sum(s, axis=1, keepdims=True)            # (B, 1, K)
    clip = jnp.abs(jnp.sum(s_lam * colsum, axis=-1, keepdims=True))   # (B, N, 1)
    # == where(clip > 1e4, 1e4/clip, 1)  (exact divide for parity with the reference)
    scaler = jnp.minimum(1.0, 10000.0 / clip)              # (B, N, 1)

    # Push gram straight into the second MXU matmul; apply the per-row scaler afterwards
    # (scaler * (G @ x) == (scaler * G) @ x since scaler is per-row).
    glob_update = jax.lax.dot_general(
        gram, glob_ref[...], (((2,), (1,)), ((0,), (0,))),
        preferred_element_type=jnp.float32)                # (B, N, d_in)

    gu_flat = (scaler * glob_update).reshape(B * N, d_in)  # sublane-aligned collapse (N%8==0)

    # Both heads (+ zero padding) in one matmul + bias + LeakyReLU(0.01), one 128-lane store.
    y = jnp.dot(gu_flat, w_ref[...], preferred_element_type=jnp.float32) + b_ref[...]
    out_ref[...] = jnp.where(y >= 0.0, y, 0.01 * y)


def prepare_pnode_params(lam, Wd, bd, Wv, bv, *, q_dim, n_q):
    """One-time parameter prep (outside the per-call path): fold lambda normalization,
    concatenate the two heads and zero-pad the output dim to a multiple of 128 lanes."""
    lam = jnp.asarray(lam).reshape(n_q)                    # robust to (n_q,1,1) input
    K = n_q * q_dim
    lam_vec = (jnp.repeat(lam, q_dim) / (n_q * q_dim)).reshape(1, 1, K)

    W_cat = jnp.concatenate([Wd, Wv], axis=1)              # (d_in, d_cat)
    b_cat = jnp.concatenate([bd.reshape(1, -1), bv.reshape(1, -1)], axis=1)
    d_in, d_cat = W_cat.shape
    d_pad = ((d_cat + 127) // 128) * 128                   # lane-dense output width
    W_pad = jnp.zeros((d_in, d_pad), W_cat.dtype).at[:, :d_cat].set(W_cat)
    b_pad = jnp.zeros((1, d_pad), b_cat.dtype).at[:, :d_cat].set(b_cat)
    return lam_vec, W_pad, b_pad


def pnode_communicator(state, glob, lam_vec, W_pad, b_pad, *, q_dim, n_q, d_out):
    B, nq, N, qd = state.shape
    assert nq == n_q and qd == q_dim
    K = n_q * q_dim
    d_disp = q_dim * n_q
    d_pad = W_pad.shape[1]

    # Per-call layout plumbing: (B, n_q, N, q_dim) -> (B, N, n_q*q_dim)
    state_flat = state.transpose(0, 2, 1, 3).reshape(B, N, K)

    # Single kernel invocation (no grid): whole problem is <100 KiB of VMEM and the
    # per-grid-step overhead would dominate at these shapes.
    out = pl.pallas_call(
        _pnode_kernel,
        out_shape=jax.ShapeDtypeStruct((B * N, d_pad), jnp.float32),
        in_specs=[pl.BlockSpec(memory_space=pltpu.MemorySpace.VMEM)] * 5,
        out_specs=pl.BlockSpec(memory_space=pltpu.MemorySpace.VMEM),
    )(state_flat, glob, lam_vec, W_pad, b_pad)

    # Split / reshape glue (pure layout): heads, then unflatten(-1,(q_dim,n_q)) + permute.
    displacement = out[:, :d_disp].reshape(B, N, q_dim, n_q).transpose(0, 3, 1, 2)
    dispatch_value = out[:, d_disp:d_disp + d_out].reshape(B, N, d_out)
    return displacement, dispatch_value


def ref_forward(state, glob, lam, Wd, bd, Wv, bv, *, q_dim, n_q):
    """Pure-JAX reference matching the PyTorch forward (eval mode)."""
    dist = jnp.einsum('bqnd,bqmd->bqnm', state, state) / q_dim
    wdist = dist * lam.reshape(1, n_q, 1, 1)
    gu = jnp.sum(wdist, axis=1) / n_q
    clip = jnp.abs(jnp.sum(gu, axis=-1, keepdims=True))
    scaler = jnp.where(clip > 10000.0, 10000.0 / clip, jnp.ones_like(clip))
    gu = scaler * gu
    glob_update = jnp.einsum('bnm,bmd->bnd', gu, glob)
    lrelu = lambda x: jnp.where(x >= 0, x, 0.01 * x)
    disp = lrelu(glob_update @ Wd + bd)
    val = lrelu(glob_update @ Wv + bv)
    B, N = glob.shape[0], glob.shape[1]
    displacement = disp.reshape(B, N, q_dim, n_q).transpose(0, 3, 1, 2)
    return displacement, val


if __name__ == "__main__":
    # small shapes consistent with the module
    B, n_q, N, q_dim = 2, 4, 16, 8
    d_in, d_out = 32, 16

    key = jax.random.PRNGKey(0)
    ks = jax.random.split(key, 7)
    state = jax.random.normal(ks[0], (B, n_q, N, q_dim), jnp.float32)
    glob = jax.random.normal(ks[1], (B, N, d_in), jnp.float32)

    # deterministic parameter init (synthetic; not a checkpoint load)
    lam = jax.random.normal(ks[2], (n_q,), jnp.float32)                 # lambda_copies (n_q,1,1) flattened
    Wd = jax.random.normal(ks[3], (d_in, q_dim * n_q), jnp.float32) * 0.1
    bd = jax.random.normal(ks[4], (1, q_dim * n_q), jnp.float32) * 0.1
    Wv = jax.random.normal(ks[5], (d_in, d_out), jnp.float32) * 0.1
    bv = jax.random.normal(ks[6], (1, d_out), jnp.float32) * 0.1

    # TODO(synk): Dropout is treated as identity (inference mode); training-mode RNG masking not implemented.
    lam_vec, W_pad, b_pad = prepare_pnode_params(lam, Wd, bd, Wv, bv, q_dim=q_dim, n_q=n_q)
    fwd = jax.jit(functools.partial(pnode_communicator, q_dim=q_dim, n_q=n_q, d_out=d_out))
    displacement, dispatch_value = fwd(state, glob, lam_vec, W_pad, b_pad)
    jax.block_until_ready((displacement, dispatch_value))

    ref_disp, ref_val = ref_forward(state, glob, lam, Wd, bd, Wv, bv, q_dim=q_dim, n_q=n_q)
    assert displacement.shape == (B, n_q, N, q_dim)
    assert dispatch_value.shape == (B, N, d_out)
    assert jnp.allclose(displacement, ref_disp, atol=1e-4, rtol=1e-4)
    assert jnp.allclose(dispatch_value, ref_val, atol=1e-4, rtol=1e-4)

    print("KERNEL_OK")
</pallas_src>

<mosaic_0001>
module attributes {stable_mosaic.version = 11 : i64} {
  func.func @_pnode_kernel(%arg0: memref<2x16x32xf32, #tpu.memory_space<vmem>>, %arg1: memref<2x16x32xf32, #tpu.memory_space<vmem>>, %arg2: memref<1x1x32xf32, #tpu.memory_space<vmem>>, %arg3: memref<32x128xf32, #tpu.memory_space<vmem>>, %arg4: memref<1x128xf32, #tpu.memory_space<vmem>>, %arg5: memref<32x128xf32, #tpu.memory_space<vmem>>) attributes {dimension_semantics = [], scalar_prefetch = 0 : i64, scratch_operands = 0 : i64, tpu.core_type = #tpu.core_type<tc>} {
    %c0 = arith.constant 0 : index
    %c0_0 = arith.constant 0 : index
    %c0_1 = arith.constant 0 : index
    %0 = vector.load %arg0[%c0, %c0_0, %c0_1] : memref<2x16x32xf32, #tpu.memory_space<vmem>>, vector<2x16x32xf32>
    %c0_2 = arith.constant 0 : index
    %c0_3 = arith.constant 0 : index
    %c0_4 = arith.constant 0 : index
    %1 = vector.load %arg2[%c0_2, %c0_3, %c0_4] : memref<1x1x32xf32, #tpu.memory_space<vmem>>, vector<1x1x32xf32>
    %2 = vector.broadcast %1 : vector<1x1x32xf32> to vector<2x16x32xf32>
    %3 = arith.mulf %0, %2 : vector<2x16x32xf32>
    %cst = arith.constant dense<0.000000e+00> : vector<2x16x16xf32>
    %4 = tpu.matmul %3, %0, %cst {dimension_numbers = #tpu.dot_dimension_numbers<[2], [2], [1], [1], [0, 0, 0, 1, 1, 1], [0], [0]>} : vector<2x16x32xf32>, vector<2x16x32xf32>, vector<2x16x16xf32> -> vector<2x16x16xf32>
    %cst_5 = arith.constant dense<0.000000e+00> : vector<2x32xf32>
    %5 = vector.multi_reduction <add>, %0, %cst_5 [1] : vector<2x16x32xf32> to vector<2x32xf32>
    %6 = vector.shape_cast %5 : vector<2x32xf32> to vector<2x1x32xf32>
    %7 = vector.broadcast %6 : vector<2x1x32xf32> to vector<2x16x32xf32>
    %8 = arith.mulf %3, %7 : vector<2x16x32xf32>
    %cst_6 = arith.constant dense<0.000000e+00> : vector<2x16xf32>
    %9 = vector.multi_reduction <add>, %8, %cst_6 [2] : vector<2x16x32xf32> to vector<2x16xf32>
    %10 = vector.shape_cast %9 : vector<2x16xf32> to vector<2x16x1xf32>
    %11 = math.absf %10 : vector<2x16x1xf32>
    %cst_7 = arith.constant 1.000000e+04 : f32
    %12 = vector.broadcast %cst_7 : f32 to vector<2x16x1xf32>
    %13 = arith.divf %12, %11 : vector<2x16x1xf32>
    %cst_8 = arith.constant 1.000000e+00 : f32
    %14 = vector.broadcast %cst_8 : f32 to vector<2x16x1xf32>
    %15 = arith.minimumf %14, %13 : vector<2x16x1xf32>
    %c0_9 = arith.constant 0 : index
    %c0_10 = arith.constant 0 : index
    %c0_11 = arith.constant 0 : index
    %16 = vector.load %arg1[%c0_9, %c0_10, %c0_11] : memref<2x16x32xf32, #tpu.memory_space<vmem>>, vector<2x16x32xf32>
    %cst_12 = arith.constant dense<0.000000e+00> : vector<2x16x32xf32>
    %17 = tpu.matmul %4, %16, %cst_12 {dimension_numbers = #tpu.dot_dimension_numbers<[2], [1], [1], [2], [0, 0, 0, 1, 1, 2], [0], [0]>} : vector<2x16x16xf32>, vector<2x16x32xf32>, vector<2x16x32xf32> -> vector<2x16x32xf32>
    %18 = vector.broadcast %15 : vector<2x16x1xf32> to vector<2x16x32xf32>
    %19 = arith.mulf %18, %17 : vector<2x16x32xf32>
    %20 = vector.shape_cast %19 : vector<2x16x32xf32> to vector<32x32xf32>
    %c0_13 = arith.constant 0 : index
    %c0_14 = arith.constant 0 : index
    %21 = vector.load %arg3[%c0_13, %c0_14] : memref<32x128xf32, #tpu.memory_space<vmem>>, vector<32x128xf32>
    %cst_15 = arith.constant dense<0.000000e+00> : vector<32x128xf32>
    %22 = tpu.matmul %20, %21, %cst_15 {dimension_numbers = #tpu.dot_dimension_numbers<[1], [0], [0], [1], [0, 0, 1, 1], [], []>} : vector<32x32xf32>, vector<32x128xf32>, vector<32x128xf32> -> vector<32x128xf32>
    %c0_16 = arith.constant 0 : index
    %c0_17 = arith.constant 0 : index
    %23 = vector.load %arg4[%c0_16, %c0_17] : memref<1x128xf32, #tpu.memory_space<vmem>>, vector<1x128xf32>
    %24 = vector.broadcast %23 : vector<1x128xf32> to vector<32x128xf32>
    %25 = arith.addf %22, %24 : vector<32x128xf32>
    %cst_18 = arith.constant 0.000000e+00 : f32
    %26 = vector.broadcast %cst_18 : f32 to vector<32x128xf32>
    %27 = arith.cmpf oge, %25, %26 : vector<32x128xf32>
    %cst_19 = arith.constant 0.00999999977 : f32
    %28 = vector.broadcast %cst_19 : f32 to vector<32x128xf32>
    %29 = arith.mulf %28, %25 : vector<32x128xf32>
    %30 = arith.select %27, %25, %29 : vector<32x128xi1>, vector<32x128xf32>
    %c0_20 = arith.constant 0 : index
    %c0_21 = arith.constant 0 : index
    %31 = vector.load %arg5[%c0_20, %c0_21] : memref<32x128xf32, #tpu.memory_space<vmem>>, vector<32x128xf32>
    tpu.vector_store %arg5[%c0_20, %c0_21], %30 {strides = array<i32>} : memref<32x128xf32, #tpu.memory_space<vmem>>, vector<32x128xf32>,
    return
  }
}

</mosaic_0001>

<llo_original>
// kernel: pnode_communicator.1
$region0: #{pnode_communicator.1}
  #allocation0 [shape = 'u32[]', space=smem, size = 0x4, offset = 0x4, fixed_abs, tag = 'smem constant byte address 0x4 - core index']
  #allocation1 [shape = 'u32[144,128]{1,0:T(1,128)}', space=vmem, size = 0x12000, scoped, tag = 'internal scratch']
  %s0 = inlined_call_operand.vmem [shape: f32[2,16,32], index: 0, kind: input, shape index: {}]
  %s1 = inlined_call_operand.vmem [shape: f32[2,16,32], index: 1, kind: input, shape index: {}]
  %s2 = inlined_call_operand.vmem [shape: f32[1,1,32], index: 2, kind: input, shape index: {}]
  %s3 = inlined_call_operand.vmem [shape: f32[32,128], index: 3, kind: input, shape index: {}]
  %s4 = inlined_call_operand.vmem [shape: f32[1,128], index: 4, kind: input, shape index: {}]
  %s5 = inlined_call_operand.vmem [shape: f32[32,128], index: 5, kind: output, shape index: {}]
  %s6 = sld [smem:[#allocation0]]
  $region30: #{pnode_communicator.1} parent=0
    _
  %s8 = ssub.s32 1, %s6
  %s9 = scalar_select 0, %s8, %s6
  // Predicated region
  $region2: #{pnode_communicator.1} parent=0 // pred_check
    _
  $region3: #{pnode_communicator.1} parent=0 // pred_check_branch
    %11 = sbr.rel (0) target = $region5
  $region4: #{pnode_communicator.1} parent=0 // pred_region
    _
  $region5: #{pnode_communicator.1} parent=0 // pred_fallthru
    _
  // Predicated region
  $region6: #{pnode_communicator.1} parent=0 // pred_check
    _
  $region7: #{pnode_communicator.1} parent=0 // pred_check_branch
    %13 = sbr.rel (0) target = $region9
  $region8: #{pnode_communicator.1} parent=0 // pred_region
    _
  $region9: #{pnode_communicator.1} parent=0 // pred_fallthru
    _
  // Predicated region
  $region10: #{pnode_communicator.1} parent=0 // pred_check
    _
  $region11: #{pnode_communicator.1} parent=0 // pred_check_branch
    %15 = sbr.rel (0) target = $region13
  $region12: #{pnode_communicator.1} parent=0 // pred_region
    _
  $region13: #{pnode_communicator.1} parent=0 // pred_fallthru
    _
  // Predicated region
  $region14: #{pnode_communicator.1} parent=0 // pred_check
    _
  $region15: #{pnode_communicator.1} parent=0 // pred_check_branch
    %17 = sbr.rel (0) target = $region17
  $region16: #{pnode_communicator.1} parent=0 // pred_region
    _
  $region17: #{pnode_communicator.1} parent=0 // pred_fallthru
    _
  // Predicated region
  $region18: #{pnode_communicator.1} parent=0 // pred_check
    _
  $region19: #{pnode_communicator.1} parent=0 // pred_check_branch
    %19 = sbr.rel (0) target = $region21
  $region20: #{pnode_communicator.1} parent=0 // pred_region
    _
  $region21: #{pnode_communicator.1} parent=0 // pred_fallthru
    _
  %v20 = vld [vmem:[%s0] sm:$0xff]
  %v21 = vld [vmem:[%s0 + $0x8] sm:$0xff]
  %v22 = vld [vmem:[%s0 + $0x10] sm:$0xff]
  %v23 = vld [vmem:[%s0 + $0x18] sm:$0xff]
  %v24 = vld [vmem:[%s2] sm:$0x1]
  %v26 = vlaneseq
  %v27 = vshrl.u32 %v26, 7
  %v28 = vsub.s32 0, %v27
  %v29 = vrot.slane %v24, %v28
  %v31 = vmul.f32 %v20, %v29
  %v32 = vmul.f32 %v21, %v29
  %v33 = vmul.f32 %v22, %v29
  %v34 = vmul.f32 %v23, %v29
  %vm35 = vcmask 261120
  %v37 = vsel %vm35, %v31, 0
  %v40 = vsel %vm35, %v32, 0
  %v43 = vsel %vm35, %v20, 0
  %v46 = vsel %vm35, %v21, 0
  %48 = vmatprep.subr.mxu0 0.0
  %49 = vmatpush1.xpose.msra.mxu0 0.0
  %50 = vmatprep.subr.mxu0 0.0
  %51 = vmatpush1.xpose.msra.mxu0 0.0
  %52 = vmatprep.subr.mxu0 0.0
  %53 = vmatpush1.xpose.msra.mxu0 0.0
  %54 = vmatprep.subr.mxu0 0.0
  %55 = vmatpush1.xpose.msra.mxu0 0.0
  %56 = vmatprep.subr.mxu0 0.0
  %57 = vmatpush1.xpose.msra.mxu0 0.0
  %58 = vmatprep.subr.mxu0 0.0
  %59 = vmatpush1.xpose.msra.mxu0 0.0
  %60 = vmatprep.subr.mxu0 0.0
  %61 = vmatpush1.xpose.msra.mxu0 0.0
  %62 = vmatprep.subr.mxu0 0.0
  %63 = vmatpush1.xpose.msra.mxu0 0.0
  %64 = vmatprep.subr.mxu0 0.0
  %65 = vmatpush1.xpose.msra.mxu0 0.0
  %66 = vmatprep.subr.mxu0 0.0
  %67 = vmatpush1.xpose.msra.mxu0 0.0
  %68 = vmatprep.subr.mxu0 0.0
  %69 = vmatpush1.xpose.msra.mxu0 0.0
  %70 = vmatprep.subr.mxu0 0.0
  %71 = vmatpush1.xpose.msra.mxu0 0.0
  %72 = vmatprep.subr.mxu0 0.0
  %73 = vmatpush1.xpose.msra.mxu0 0.0
  %74 = vmatprep.subr.mxu0 0.0
  %75 = vmatpush1.xpose.msra.mxu0 0.0
  %76 = vmatprep.subr.mxu0 0.0
  %77 = vmatpush1.xpose.msra.mxu0 %v46
  %78 = vmatprep.subr.mxu0 0.0
  %79 = vmatpush1.xpose.msra.mxu0 %v43
  %80 = vmatprep.subr.mxu0 0.0
  %81 = vmatpush2.xpose.msra.mxu0 0.0
  %82 = vmatprep.subr.mxu0 0.0
  %83 = vmatpush2.xpose.msra.mxu0 0.0
  %84 = vmatprep.subr.mxu0 0.0
  %85 = vmatpush2.xpose.msra.mxu0 0.0
  %86 = vmatprep.subr.mxu0 0.0
  %87 = vmatpush2.xpose.msra.mxu0 0.0
  %88 = vmatprep.subr.mxu0 0.0
  %89 = vmatpush2.xpose.msra.mxu0 0.0
  %90 = vmatprep.subr.mxu0 0.0
  %91 = vmatpush2.xpose.msra.mxu0 0.0
  %92 = vmatprep.subr.mxu0 0.0
  %93 = vmatpush2.xpose.msra.mxu0 0.0
  %94 = vmatprep.subr.mxu0 0.0
  %95 = vmatpush2.xpose.msra.mxu0 0.0
  %96 = vmatprep.subr.mxu0 0.0
  %97 = vmatpush2.xpose.msra.mxu0 0.0
  %98 = vmatprep.subr.mxu0 0.0
  %99 = vmatpush2.xpose.msra.mxu0 0.0
  %100 = vmatprep.subr.mxu0 0.0
  %101 = vmatpush2.xpose.msra.mxu0 0.0
  %102 = vmatprep.subr.mxu0 0.0
  %103 = vmatpush2.xpose.msra.mxu0 0.0
  %104 = vmatprep.subr.mxu0 0.0
  %105 = vmatpush2.xpose.msra.mxu0 0.0
  %106 = vmatprep.subr.mxu0 0.0
  %107 = vmatpush2.xpose.msra.mxu0 0.0
  %108 = vmatprep.subr.mxu0 0.0
  %109 = vmatpush2.xpose.msra.mxu0 0.0
  %110 = vmatprep.subr.mxu0 0.0
  %111 = vmatpush2.xpose.msra.mxu0 0.0
  %112 = vmatprep.mubr.f32.mxu0 0.0
  %113 = vmatmul.mubr.f32.gmra.mxu0 %v37
  %v114 = vpop.f32.mrf.mxu0
  %v115 = vadd.f32 0.0, %v114
  %v116 = vpop.f32.mrf.mxu0
  %117 = vmatprep.mubr.f32.mxu0 0.0
  %118 = vmatmul.mubr.f32.gmra.mxu0 %v40
  %v119 = vpop.f32.mrf.mxu0
  %v120 = vadd.f32 0.0, %v119
  %v121 = vpop.f32.mrf.mxu0
  %122 = vdwg.mxu0
  %v124 = vsel %vm35, %v33, 0
  %v127 = vsel %vm35, %v34, 0
  %v130 = vsel %vm35, %v22, 0
  %v133 = vsel %vm35, %v23, 0
  %135 = vmatprep.subr.mxu0 0.0
  %136 = vmatpush1.xpose.msra.mxu0 0.0
  %137 = vmatprep.subr.mxu0 0.0
  %138 = vmatpush1.xpose.msra.mxu0 0.0
  %139 = vmatprep.subr.mxu0 0.0
  %140 = vmatpush1.xpose.msra.mxu0 0.0
  %141 = vmatprep.subr.mxu0 0.0
  %142 = vmatpush1.xpose.msra.mxu0 0.0
  %143 = vmatprep.subr.mxu0 0.0
  %144 = vmatpush1.xpose.msra.mxu0 0.0
  %145 = vmatprep.subr.mxu0 0.0
  %146 = vmatpush1.xpose.msra.mxu0 0.0
  %147 = vmatprep.subr.mxu0 0.0
  %148 = vmatpush1.xpose.msra.mxu0 0.0
  %149 = vmatprep.subr.mxu0 0.0
  %150 = vmatpush1.xpose.msra.mxu0 0.0
  %151 = vmatprep.subr.mxu0 0.0
  %152 = vmatpush1.xpose.msra.mxu0 0.0
  %153 = vmatprep.subr.mxu0 0.0
  %154 = vmatpush1.xpose.msra.mxu0 0.0
  %155 = vmatprep.subr.mxu0 0.0
  %156 = vmatpush1.xpose.msra.mxu0 0.0
  %157 = vmatprep.subr.mxu0 0.0
  %158 = vmatpush1.xpose.msra.mxu0 0.0
  %159 = vmatprep.subr.mxu0 0.0
  %160 = vmatpush1.xpose.msra.mxu0 0.0
  %161 = vmatprep.subr.mxu0 0.0
  %162 = vmatpush1.xpose.msra.mxu0 0.0
  %163 = vmatprep.subr.mxu0 0.0
  %164 = vmatpush1.xpose.msra.mxu0 %v133
  %165 = vmatprep.subr.mxu0 0.0
  %166 = vmatpush1.xpose.msra.mxu0 %v130
  %167 = vmatprep.subr.mxu0 0.0
  %168 = vmatpush2.xpose.msra.mxu0 0.0
  %169 = vmatprep.subr.mxu0 0.0
  %170 = vmatpush2.xpose.msra.mxu0 0.0
  %171 = vmatprep.subr.mxu0 0.0
  %172 = vmatpush2.xpose.msra.mxu0 0.0
  %173 = vmatprep.subr.mxu0 0.0
  %174 = vmatpush2.xpose.msra.mxu0 0.0
  %175 = vmatprep.subr.mxu0 0.0
  %176 = vmatpush2.xpose.msra.mxu0 0.0
  %177 = vmatprep.subr.mxu0 0.0
  %178 = vmatpush2.xpose.msra.mxu0 0.0
  %179 = vmatprep.subr.mxu0 0.0
  %180 = vmatpush2.xpose.msra.mxu0 0.0
  %181 = vmatprep.subr.mxu0 0.0
  %182 = vmatpush2.xpose.msra.mxu0 0.0
  %183 = vmatprep.subr.mxu0 0.0
  %184 = vmatpush2.xpose.msra.mxu0 0.0
  %185 = vmatprep.subr.mxu0 0.0
  %186 = vmatpush2.xpose.msra.mxu0 0.0
  %187 = vmatprep.subr.mxu0 0.0
  %188 = vmatpush2.xpose.msra.mxu0 0.0
  %189 = vmatprep.subr.mxu0 0.0
  %190 = vmatpush2.xpose.msra.mxu0 0.0
  %191 = vmatprep.subr.mxu0 0.0
  %192 = vmatpush2.xpose.msra.mxu0 0.0
  %193 = vmatprep.subr.mxu0 0.0
  %194 = vmatpush2.xpose.msra.mxu0 0.0
  %195 = vmatprep.subr.mxu0 0.0
  %196 = vmatpush2.xpose.msra.mxu0 0.0
  %197 = vmatprep.subr.mxu0 0.0
  %198 = vmatpush2.xpose.msra.mxu0 0.0
  %199 = vmatprep.mubr.f32.mxu0 0.0
  %200 = vmatmul.mubr.f32.gmra.mxu0 %v124
  %v201 = vpop.f32.mrf.mxu0
  %v202 = vadd.f32 0.0, %v201
  %v203 = vpop.f32.mrf.mxu0
  %204 = vmatprep.mubr.f32.mxu0 0.0
  %205 = vmatmul.mubr.f32.gmra.mxu0 %v127
  %v206 = vpop.f32.mrf.mxu0
  %v207 = vadd.f32 0.0, %v206
  %v208 = vpop.f32.mrf.mxu0
  %209 = vdwg.mxu0
  %v210 = vsel %vm35, %v20, 0.0
  %v211 = vsel %vm35, %v21, 0.0
  %v212 = vadd.f32 %v210, %v211
  %v213 = vrot.slane %v212, 4
  %v214 = vadd.f32 %v212, %v213
  %v215 = vrot.slane %v214, 2
  %v216 = vadd.f32 %v214, %v215
  %v217 = vrot.slane %v216, 1
  %v218 = vadd.f32 %v216, %v217
  %v219 = vsel %vm35, %v22, 0.0
  %v220 = vsel %vm35, %v23, 0.0
  %v221 = vadd.f32 %v219, %v220
  %v222 = vrot.slane %v221, 4
  %v223 = vadd.f32 %v221, %v222
  %v224 = vrot.slane %v223, 2
  %v225 = vadd.f32 %v223, %v224
  %v226 = vrot.slane %v225, 1
  %v227 = vadd.f32 %v225, %v226
  %v228 = vmul.f32 %v31, %v218
  %v229 = vmul.f32 %v32, %v218
  %v230 = vmul.f32 %v33, %v227
  %v231 = vmul.f32 %v34, %v227
  %v232 = vsel %vm35, %v228, 0.0
  %233 = vadd.xlane.f32.xlu0 %v232
  %v234 = vpop.xlane.xlu0 %233
  %v235 = vsel %vm35, %v229, 0.0
  %236 = vadd.xlane.f32.xlu0 %v235
  %v237 = vpop.xlane.xlu0 %236
  %v238 = vsel %vm35, %v230, 0.0
  %239 = vadd.xlane.f32.xlu0 %v238
  %v240 = vpop.xlane.xlu0 %239
  %v241 = vsel %vm35, %v231, 0.0
  %242 = vadd.xlane.f32.xlu0 %v241
  %v243 = vpop.xlane.xlu0 %242
  %v244 = vand.u32 2147483647, %v234
  %v245 = vand.u32 2147483647, %v237
  %v246 = vand.u32 2147483647, %v240
  %v247 = vand.u32 2147483647, %v243
  %v248 = vrcp.pop %v244
  %v249 = vmul.f32 10000.0, %v248
  %v250 = vrcp.pop %v245
  %v251 = vmul.f32 10000.0, %v250
  %v252 = vrcp.pop %v246
  %v253 = vmul.f32 10000.0, %v252
  %v254 = vrcp.pop %v247
  %v255 = vmul.f32 10000.0, %v254
  %v256 = vmin.f32 %v249, 1.0
  %v257 = vmin.f32 %v251, 1.0
  %v258 = vmin.f32 %v253, 1.0
  %v259 = vmin.f32 %v255, 1.0
  %v260 = vld [vmem:[%s1] sm:$0xff]
  %v261 = vld [vmem:[%s1 + $0x8] sm:$0xff]
  %v262 = vld [vmem:[%s1 + $0x10] sm:$0xff]
  %v263 = vld [vmem:[%s1 + $0x18] sm:$0xff]
  %vm264 = vcmask 130048
  %v266 = vsel %vm264, %v115, 0
  %v269 = vsel %vm264, %v120, 0
  %271 = vmatprep.subr.mxu0 0.0
  %272 = vmatpush1.msra.mxu0 0.0
  %273 = vmatprep.subr.mxu0 0.0
  %274 = vmatpush1.msra.mxu0 0.0
  %275 = vmatprep.subr.mxu0 0.0
  %276 = vmatpush1.msra.mxu0 0.0
  %277 = vmatprep.subr.mxu0 0.0
  %278 = vmatpush1.msra.mxu0 0.0
  %279 = vmatprep.subr.mxu0 0.0
  %280 = vmatpush1.msra.mxu0 0.0
  %281 = vmatprep.subr.mxu0 0.0
  %282 = vmatpush1.msra.mxu0 0.0
  %283 = vmatprep.subr.mxu0 0.0
  %284 = vmatpush1.msra.mxu0 0.0
  %285 = vmatprep.subr.mxu0 0.0
  %286 = vmatpush1.msra.mxu0 0.0
  %287 = vmatprep.subr.mxu0 0.0
  %288 = vmatpush1.msra.mxu0 0.0
  %289 = vmatprep.subr.mxu0 0.0
  %290 = vmatpush1.msra.mxu0 0.0
  %291 = vmatprep.subr.mxu0 0.0
  %292 = vmatpush1.msra.mxu0 0.0
  %293 = vmatprep.subr.mxu0 0.0
  %294 = vmatpush1.msra.mxu0 0.0
  %295 = vmatprep.subr.mxu0 0.0
  %296 = vmatpush1.msra.mxu0 0.0
  %297 = vmatprep.subr.mxu0 0.0
  %298 = vmatpush1.msra.mxu0 0.0
  %299 = vmatprep.subr.mxu0 0.0
  %300 = vmatpush1.msra.mxu0 %v261
  %301 = vmatprep.subr.mxu0 0.0
  %302 = vmatpush1.msra.mxu0 %v260
  %303 = vmatprep.subr.mxu0 0.0
  %304 = vmatpush2.msra.mxu0 0.0
  %305 = vmatprep.subr.mxu0 0.0
  %306 = vmatpush2.msra.mxu0 0.0
  %307 = vmatprep.subr.mxu0 0.0
  %308 = vmatpush2.msra.mxu0 0.0
  %309 = vmatprep.subr.mxu0 0.0
  %310 = vmatpush2.msra.mxu0 0.0
  %311 = vmatprep.subr.mxu0 0.0
  %312 = vmatpush2.msra.mxu0 0.0
  %313 = vmatprep.subr.mxu0 0.0
  %314 = vmatpush2.msra.mxu0 0.0
  %315 = vmatprep.subr.mxu0 0.0
  %316 = vmatpush2.msra.mxu0 0.0
  %317 = vmatprep.subr.mxu0 0.0
  %318 = vmatpush2.msra.mxu0 0.0
  %319 = vmatprep.subr.mxu0 0.0
  %320 = vmatpush2.msra.mxu0 0.0
  %321 = vmatprep.subr.mxu0 0.0
  %322 = vmatpush2.msra.mxu0 0.0
  %323 = vmatprep.subr.mxu0 0.0
  %324 = vmatpush2.msra.mxu0 0.0
  %325 = vmatprep.subr.mxu0 0.0
  %326 = vmatpush2.msra.mxu0 0.0
  %327 = vmatprep.subr.mxu0 0.0
  %328 = vmatpush2.msra.mxu0 0.0
  %329 = vmatprep.subr.mxu0 0.0
  %330 = vmatpush2.msra.mxu0 0.0
  %331 = vmatprep.subr.mxu0 0.0
  %332 = vmatpush2.msra.mxu0 0.0
  %333 = vmatprep.subr.mxu0 0.0
  %334 = vmatpush2.msra.mxu0 0.0
  %335 = vmatprep.mubr.f32.mxu0 0.0
  %336 = vmatmul.mubr.f32.gmra.mxu0 %v266
  %v337 = vpop.f32.mrf.mxu0
  %v338 = vadd.f32 0.0, %v337
  %v339 = vpop.f32.mrf.mxu0
  %340 = vmatprep.mubr.f32.mxu0 0.0
  %341 = vmatmul.mubr.f32.gmra.mxu0 %v269
  %v342 = vpop.f32.mrf.mxu0
  %v343 = vadd.f32 0.0, %v342
  %v344 = vpop.f32.mrf.mxu0
  %345 = vdwg.mxu0
  %v347 = vsel %vm264, %v202, 0
  %v350 = vsel %vm264, %v207, 0
  %352 = vmatprep.subr.mxu0 0.0
  %353 = vmatpush1.msra.mxu0 0.0
  %354 = vmatprep.subr.mxu0 0.0
  %355 = vmatpush1.msra.mxu0 0.0
  %356 = vmatprep.subr.mxu0 0.0
  %357 = vmatpush1.msra.mxu0 0.0
  %358 = vmatprep.subr.mxu0 0.0
  %359 = vmatpush1.msra.mxu0 0.0
  %360 = vmatprep.subr.mxu0 0.0
  %361 = vmatpush1.msra.mxu0 0.0
  %362 = vmatprep.subr.mxu0 0.0
  %363 = vmatpush1.msra.mxu0 0.0
  %364 = vmatprep.subr.mxu0 0.0
  %365 = vmatpush1.msra.mxu0 0.0
  %366 = vmatprep.subr.mxu0 0.0
  %367 = vmatpush1.msra.mxu0 0.0
  %368 = vmatprep.subr.mxu0 0.0
  %369 = vmatpush1.msra.mxu0 0.0
  %370 = vmatprep.subr.mxu0 0.0
  %371 = vmatpush1.msra.mxu0 0.0
  %372 = vmatprep.subr.mxu0 0.0
  %373 = vmatpush1.msra.mxu0 0.0
  %374 = vmatprep.subr.mxu0 0.0
  %375 = vmatpush1.msra.mxu0 0.0
  %376 = vmatprep.subr.mxu0 0.0
  %377 = vmatpush1.msra.mxu0 0.0
  %378 = vmatprep.subr.mxu0 0.0
  %379 = vmatpush1.msra.mxu0 0.0
  %380 = vmatprep.subr.mxu0 0.0
  %381 = vmatpush1.msra.mxu0 %v263
  %382 = vmatprep.subr.mxu0 0.0
  %383 = vmatpush1.msra.mxu0 %v262
  %384 = vmatprep.subr.mxu0 0.0
  %385 = vmatpush2.msra.mxu0 0.0
  %386 = vmatprep.subr.mxu0 0.0
  %387 = vmatpush2.msra.mxu0 0.0
  %388 = vmatprep.subr.mxu0 0.0
  %389 = vmatpush2.msra.mxu0 0.0
  %390 = vmatprep.subr.mxu0 0.0
  %391 = vmatpush2.msra.mxu0 0.0
  %392 = vmatprep.subr.mxu0 0.0
  %393 = vmatpush2.msra.mxu0 0.0
  %394 = vmatprep.subr.mxu0 0.0
  %395 = vmatpush2.msra.mxu0 0.0
  %396 = vmatprep.subr.mxu0 0.0
  %397 = vmatpush2.msra.mxu0 0.0
  %398 = vmatprep.subr.mxu0 0.0
  %399 = vmatpush2.msra.mxu0 0.0
  %400 = vmatprep.subr.mxu0 0.0
  %401 = vmatpush2.msra.mxu0 0.0
  %402 = vmatprep.subr.mxu0 0.0
  %403 = vmatpush2.msra.mxu0 0.0
  %404 = vmatprep.subr.mxu0 0.0
  %405 = vmatpush2.msra.mxu0 0.0
  %406 = vmatprep.subr.mxu0 0.0
  %407 = vmatpush2.msra.mxu0 0.0
  %408 = vmatprep.subr.mxu0 0.0
  %409 = vmatpush2.msra.mxu0 0.0
  %410 = vmatprep.subr.mxu0 0.0
  %411 = vmatpush2.msra.mxu0 0.0
  %412 = vmatprep.subr.mxu0 0.0
  %413 = vmatpush2.msra.mxu0 0.0
  %414 = vmatprep.subr.mxu0 0.0
  %415 = vmatpush2.msra.mxu0 0.0
  %416 = vmatprep.mubr.f32.mxu0 0.0
  %417 = vmatmul.mubr.f32.gmra.mxu0 %v347
  %v418 = vpop.f32.mrf.mxu0
  %v419 = vadd.f32 0.0, %v418
  %v420 = vpop.f32.mrf.mxu0
  %421 = vmatprep.mubr.f32.mxu0 0.0
  %422 = vmatmul.mubr.f32.gmra.mxu0 %v350
  %v423 = vpop.f32.mrf.mxu0
  %v424 = vadd.f32 0.0, %v423
  %v425 = vpop.f32.mrf.mxu0
  %426 = vdwg.mxu0
  %v427 = vmul.f32 %v256, %v338
  %v428 = vmul.f32 %v257, %v343
  %v429 = vmul.f32 %v258, %v419
  %v430 = vmul.f32 %v259, %v424
  %v431 = vld [vmem:[%s3] sm:$0xff]
  %v432 = vld [vmem:[%s3 + $0x8] sm:$0xff]
  %v433 = vld [vmem:[%s3 + $0x10] sm:$0xff]
  %v434 = vld [vmem:[%s3 + $0x18] sm:$0xff]
  %v435 = vld [vmem:[%s4] sm:$0x1]
  %v437 = vlaneseq
  %v438 = vshrl.u32 %v437, 7
  %v439 = vsub.s32 0, %v438
  %v440 = vrot.slane %v435, %v439
  %v443 = vsel %vm35, %v427, 0
  %v446 = vsel %vm35, %v428, 0
  %v449 = vsel %vm35, %v429, 0
  %v452 = vsel %vm35, %v430, 0
  %454 = vmatprep.subr.mxu0 0.0
  %455 = vmatpush1.msra.mxu0 0.0
  %456 = vmatprep.subr.mxu0 0.0
  %457 = vmatpush1.msra.mxu0 0.0
  %458 = vmatprep.subr.mxu0 0.0
  %459 = vmatpush1.msra.mxu0 0.0
  %460 = vmatprep.subr.mxu0 0.0
  %461 = vmatpush1.msra.mxu0 0.0
  %462 = vmatprep.subr.mxu0 0.0
  %463 = vmatpush1.msra.mxu0 0.0
  %464 = vmatprep.subr.mxu0 0.0
  %465 = vmatpush1.msra.mxu0 0.0
  %466 = vmatprep.subr.mxu0 0.0
  %467 = vmatpush1.msra.mxu0 0.0
  %468 = vmatprep.subr.mxu0 0.0
  %469 = vmatpush1.msra.mxu0 0.0
  %470 = vmatprep.subr.mxu0 0.0
  %471 = vmatpush1.msra.mxu0 0.0
  %472 = vmatprep.subr.mxu0 0.0
  %473 = vmatpush1.msra.mxu0 0.0
  %474 = vmatprep.subr.mxu0 0.0
  %475 = vmatpush1.msra.mxu0 0.0
  %476 = vmatprep.subr.mxu0 0.0
  %477 = vmatpush1.msra.mxu0 0.0
  %478 = vmatprep.subr.mxu0 0.0
  %479 = vmatpush1.msra.mxu0 %v434
  %480 = vmatprep.subr.mxu0 0.0
  %481 = vmatpush1.msra.mxu0 %v433
  %482 = vmatprep.subr.mxu0 0.0
  %483 = vmatpush1.msra.mxu0 %v432
  %484 = vmatprep.subr.mxu0 0.0
  %485 = vmatpush1.msra.mxu0 %v431
  %486 = vmatprep.subr.mxu0 0.0
  %487 = vmatpush2.msra.mxu0 0.0
  %488 = vmatprep.subr.mxu0 0.0
  %489 = vmatpush2.msra.mxu0 0.0
  %490 = vmatprep.subr.mxu0 0.0
  %491 = vmatpush2.msra.mxu0 0.0
  %492 = vmatprep.subr.mxu0 0.0
  %493 = vmatpush2.msra.mxu0 0.0
  %494 = vmatprep.subr.mxu0 0.0
  %495 = vmatpush2.msra.mxu0 0.0
  %496 = vmatprep.subr.mxu0 0.0
  %497 = vmatpush2.msra.mxu0 0.0
  %498 = vmatprep.subr.mxu0 0.0
  %499 = vmatpush2.msra.mxu0 0.0
  %500 = vmatprep.subr.mxu0 0.0
  %501 = vmatpush2.msra.mxu0 0.0
  %502 = vmatprep.subr.mxu0 0.0
  %503 = vmatpush2.msra.mxu0 0.0
  %504 = vmatprep.subr.mxu0 0.0
  %505 = vmatpush2.msra.mxu0 0.0
  %506 = vmatprep.subr.mxu0 0.0
  %507 = vmatpush2.msra.mxu0 0.0
  %508 = vmatprep.subr.mxu0 0.0
  %509 = vmatpush2.msra.mxu0 0.0
  %510 = vmatprep.subr.mxu0 0.0
  %511 = vmatpush2.msra.mxu0 0.0
  %512 = vmatprep.subr.mxu0 0.0
  %513 = vmatpush2.msra.mxu0 0.0
  %514 = vmatprep.subr.mxu0 0.0
  %515 = vmatpush2.msra.mxu0 0.0
  %516 = vmatprep.subr.mxu0 0.0
  %517 = vmatpush2.msra.mxu0 0.0
  %518 = vmatprep.mubr.f32.mxu0 0.0
  %519 = vmatmul.mubr.f32.gmra.mxu0 %v443
  %v520 = vpop.f32.mrf.mxu0
  %v521 = vadd.f32 %v440, %v520
  %v522 = vpop.f32.mrf.mxu0
  %523 = vmatprep.mubr.f32.mxu0 0.0
  %524 = vmatmul.mubr.f32.gmra.mxu0 %v446
  %v525 = vpop.f32.mrf.mxu0
  %v526 = vadd.f32 %v440, %v525
  %v527 = vpop.f32.mrf.mxu0
  %528 = vmatprep.mubr.f32.mxu0 0.0
  %529 = vmatmul.mubr.f32.gmra.mxu0 %v449
  %v530 = vpop.f32.mrf.mxu0
  %v531 = vadd.f32 %v440, %v530
  %v532 = vpop.f32.mrf.mxu0
  %533 = vmatprep.mubr.f32.mxu0 0.0
  %534 = vmatmul.mubr.f32.gmra.mxu0 %v452
  %v535 = vpop.f32.mrf.mxu0
  %v536 = vadd.f32 %v440, %v535
  %v537 = vpop.f32.mrf.mxu0
  %538 = vdwg.mxu0
  %vm539 = vcmp.ge.f32.partialorder %v521, 0.0
  %vm540 = vcmp.ge.f32.partialorder %v526, 0.0
  %vm541 = vcmp.ge.f32.partialorder %v531, 0.0
  %vm542 = vcmp.ge.f32.partialorder %v536, 0.0
  %v543 = vmul.f32 %v521, 0.01
  %v544 = vmul.f32 %v526, 0.01
  %v545 = vmul.f32 %v531, 0.01
  %v546 = vmul.f32 %v536, 0.01
  %v547 = vsel %vm539, %v521, %v543
  %v548 = vsel %vm540, %v526, %v544
  %v549 = vsel %vm541, %v531, %v545
  %v550 = vsel %vm542, %v536, %v546
  %551 = vst [vmem:[%s5] sm:$0xff] %v547
  %552 = vst [vmem:[%s5 + $0x8] sm:$0xff] %v548
  %553 = vst [vmem:[%s5 + $0x10] sm:$0xff] %v549
  %554 = vst [vmem:[%s5 + $0x18] sm:$0xff] %v550
  // Predicated region
  $region22: #{pnode_communicator.1} parent=0 // pred_check
    _
  $region23: #{pnode_communicator.1} parent=0 // pred_check_branch
    %556 = sbr.rel (0) target = $region25
  $region24: #{pnode_communicator.1} parent=0 // pred_region
    _
  $region25: #{pnode_communicator.1} parent=0 // pred_fallthru
    _
  // Predicated region
  $region26: #{pnode_communicator.1} parent=0 // pred_check
    _
  $region27: #{pnode_communicator.1} parent=0 // pred_check_branch
    %558 = sbr.rel (0) target = $region29
  $region28: #{pnode_communicator.1} parent=0 // pred_region
    _
  $region29: #{pnode_communicator.1} parent=0 // pred_fallthru
    _

</llo_original>
